<compile_context>
chip_gen: v5e
topology: v5e:2x2
jax: 0.10.0
libtpu: 0.0.40
codegen_flags: <defaults>
</compile_context>

<pallas_src>
import functools

import jax
import jax.numpy as jnp
from jax.experimental import pallas as pl
from jax.experimental.pallas import tpu as pltpu


# ----------------------------- Pallas kernel ------------------------------- #

def egcn_fused_kernel(a_ref, x_ref, w0_ref, wcat_ref, bcat_ref, out_ref, xw_ref):
    """Fused  out_tile = relu( A_hat_tile @ (X @ GRU(W_init)) ).

    Grid step 0 evolves the weight with a single lane-dense (C, 4C) matmul,
    applies the GRU gate math on the VPU/EUP, and writes X @ W_t to VMEM
    scratch; every subsequent A_hat row tile reuses the scratch.
    """
    @pl.when(pl.program_id(0) == 0)
    def _():
        C = w0_ref.shape[0]
        w0 = w0_ref[...]
        # gates: g = W_init @ [Wir^T+Whr^T | Wiz^T+Whz^T | Win^T | Whn^T] + biases
        g = jnp.dot(w0, wcat_ref[...], preferred_element_type=jnp.float32) \
            + bcat_ref[...]
        r = jax.nn.sigmoid(g[:, 0:C])
        z = jax.nn.sigmoid(g[:, C:2 * C])
        n = jnp.tanh(g[:, 2 * C:3 * C] + r * g[:, 3 * C:4 * C])   # b_hn inside r*(.)
        w_t = (1.0 - z) * n + z * w0
        xw_ref[...] = jnp.dot(x_ref[...], w_t, preferred_element_type=jnp.float32)

    h = jnp.dot(a_ref[...], xw_ref[...], preferred_element_type=jnp.float32)
    out_ref[...] = jnp.maximum(h, 0.0).astype(out_ref.dtype)


# ------------------------------ Wrappers ----------------------------------- #

def prepare_gru_params(wih, whh, bih, bhh):
    """Pack torch-layout GRU params (gate order [r, z, n]) for the fused kernel.

    wih / whh: (3, C, C) torch layout (W_g: (out, in));  bih / bhh: (3, 1, C).
    Since x == h == W_init in EvolveGCN-O, the r and z gates use summed weights.
    Returns w_cat: (C, 4C), b_cat: (1, 4C).
    """
    wih_t = jnp.transpose(wih, (0, 2, 1))
    whh_t = jnp.transpose(whh, (0, 2, 1))
    w_cat = jnp.concatenate(
        [wih_t[0] + whh_t[0], wih_t[1] + whh_t[1], wih_t[2], whh_t[2]], axis=1)
    b_cat = jnp.concatenate(
        [bih[0] + bhh[0], bih[1] + bhh[1], bih[2], bhh[2]], axis=1)
    return w_cat, b_cat


def build_normalized_adjacency(edge_index, num_nodes, edge_weight=None):
    """gcn_norm (improved=False, add_self_loops=True) -> dense A_hat (N, N).

    A_hat[col, row] accumulates deg^-1/2[row] * w * deg^-1/2[col], matching
    PyG propagate with aggr='add' (out[i] = sum_{j->i} w_norm * x[j]).
    """
    row, col = edge_index[0], edge_index[1]
    if edge_weight is None:
        edge_weight = jnp.ones(row.shape, jnp.float32)
    loops = jnp.arange(num_nodes, dtype=row.dtype)
    row = jnp.concatenate([row, loops])
    col = jnp.concatenate([col, loops])
    edge_weight = jnp.concatenate([edge_weight, jnp.ones((num_nodes,), jnp.float32)])

    deg = jax.ops.segment_sum(edge_weight, col, num_segments=num_nodes)
    deg_inv_sqrt = jnp.where(deg > 0, jax.lax.rsqrt(deg), 0.0)
    norm_w = deg_inv_sqrt[row] * edge_weight * deg_inv_sqrt[col]

    a_hat = jnp.zeros((num_nodes, num_nodes), jnp.float32)
    a_hat = a_hat.at[col, row].add(norm_w)
    return a_hat
    # TODO(synk): for large sparse graphs, replace the dense A_hat (O(N^2)) with a
    # scalar-prefetch CSR gather kernel (PrefetchScalarGridSpec) that scales with E.


@functools.partial(jax.jit, static_argnames=("tm",))
def egcn_layer_forward(x, edge_index, params, edge_weight=None, tm=None):
    """EGCNLayer.forward: EvolveGCN-O conv followed by ReLU (dropout p=0)."""
    N, C = x.shape
    a_hat = build_normalized_adjacency(edge_index, N, edge_weight)

    if tm is None:
        tm = N if N <= 512 else 128   # single grid step at small N
    assert N % tm == 0, "N must be divisible by the row-tile size"

    flops = 2 * N * N * C + 2 * N * C * C + 2 * C * C * (4 * C)
    bytes_accessed = 4 * (N * N + 2 * N * C + C * C + C * 4 * C + 4 * C)

    return pl.pallas_call(
        egcn_fused_kernel,
        out_shape=jax.ShapeDtypeStruct((N, C), jnp.float32),
        grid=(N // tm,),
        in_specs=[
            pl.BlockSpec((tm, N), lambda i: (i, 0)),      # A_hat row tile
            pl.BlockSpec((N, C), lambda i: (0, 0)),       # X (VMEM-resident)
            pl.BlockSpec((C, C), lambda i: (0, 0)),       # W_init (resident)
            pl.BlockSpec((C, 4 * C), lambda i: (0, 0)),   # packed GRU weights
            pl.BlockSpec((1, 4 * C), lambda i: (0, 0)),   # packed GRU biases
        ],
        out_specs=pl.BlockSpec((tm, C), lambda i: (i, 0)),
        scratch_shapes=[pltpu.VMEM((N, C), jnp.float32)],  # X @ W_t, computed once
        compiler_params=pltpu.CompilerParams(
            # scratch carries X@W_t across row-tile steps -> keep "arbitrary";
            # (at the test size the grid has a single step, so this is moot).
            dimension_semantics=("arbitrary",)),
        cost_estimate=pl.CostEstimate(
            flops=flops, transcendentals=3 * C * C, bytes_accessed=bytes_accessed),
    )(a_hat, x, params["initial_weight"], params["w_cat"], params["b_cat"])


# ------------------------------ Reference ---------------------------------- #

def reference_forward(x, edge_index, params, edge_weight=None):
    """Pure-JAX reference mirroring the PyTorch module (per-gate GRU math)."""
    w0 = params["initial_weight"]
    wih_t, whh_t = params["wih_t"], params["whh_t"]
    bih, bhh = params["bih"], params["bhh"]

    def gate(g):
        gi = w0 @ wih_t[g] + bih[g]
        gh = w0 @ whh_t[g] + bhh[g]
        return gi, gh

    gi_r, gh_r = gate(0)
    gi_z, gh_z = gate(1)
    gi_n, gh_n = gate(2)
    r = jax.nn.sigmoid(gi_r + gh_r)
    z = jax.nn.sigmoid(gi_z + gh_z)
    n = jnp.tanh(gi_n + r * gh_n)
    w = (1.0 - z) * n + z * w0

    a_hat = build_normalized_adjacency(edge_index, x.shape[0], edge_weight)
    return jnp.maximum(a_hat @ (x @ w), 0.0)


# --------------------------------- Main ------------------------------------ #

if __name__ == "__main__":
    HIDDEN = 32      # hidden_dim / in_channels C
    NUM_NODES = 128  # num_nodes N
    NUM_EDGES = 256

    key = jax.random.PRNGKey(0)
    k_x, k_src, k_off, k_w0, k_wih, k_whh, k_bih, k_bhh = jax.random.split(key, 8)

    # node features
    x = jax.random.normal(k_x, (NUM_NODES, HIDDEN), jnp.float32)

    # random graph without self loops (self loops are added by gcn_norm)
    src = jax.random.randint(k_src, (NUM_EDGES,), 0, NUM_NODES, jnp.int32)
    off = jax.random.randint(k_off, (NUM_EDGES,), 1, NUM_NODES, jnp.int32)
    dst = (src + off) % NUM_NODES
    edge_index = jnp.stack([src, dst], axis=0)   # (2, E)

    # parameters (deterministic, matching torch init distributions)
    C = HIDDEN
    glorot_b = (6.0 / (C + C)) ** 0.5                       # glorot for initial_weight
    k_gru = 1.0 / (C ** 0.5)                                # torch GRU default init
    initial_weight = jax.random.uniform(k_w0, (C, C), jnp.float32, -glorot_b, glorot_b)
    # torch layout weight_ih_l0: (3C, C), gate order [r, z, n] -> (3, C, C)
    wih = jax.random.uniform(k_wih, (3, C, C), jnp.float32, -k_gru, k_gru)
    whh = jax.random.uniform(k_whh, (3, C, C), jnp.float32, -k_gru, k_gru)
    bih = jax.random.uniform(k_bih, (3, 1, C), jnp.float32, -k_gru, k_gru)
    bhh = jax.random.uniform(k_bhh, (3, 1, C), jnp.float32, -k_gru, k_gru)

    w_cat, b_cat = prepare_gru_params(wih, whh, bih, bhh)

    params = dict(
        initial_weight=initial_weight,
        w_cat=w_cat, b_cat=b_cat,                              # fused-kernel packing
        wih_t=jnp.transpose(wih, (0, 2, 1)),                   # reference-only
        whh_t=jnp.transpose(whh, (0, 2, 1)),
        bih=bih, bhh=bhh,
    )

    out = egcn_layer_forward(x, edge_index, params)
    out = jax.block_until_ready(out)

    ref = reference_forward(x, edge_index, params)
    assert out.shape == (NUM_NODES, HIDDEN) and out.dtype == jnp.float32
    assert jnp.allclose(out, ref, rtol=1e-4, atol=1e-5), "mismatch vs JAX reference"

    # TODO(synk): dropout (p=0.0) is an identity here; nonzero-p training-mode
    # dropout would need pltpu.prng_random_bits inside the kernel.
    print("KERNEL_OK")
</pallas_src>

<mosaic_0001>
module attributes {stable_mosaic.version = 11 : i64} {
  func.func @egcn_fused_kernel(%arg0: i32, %arg1: memref<128x128xf32, #tpu.memory_space<vmem>>, %arg2: memref<128x32xf32, #tpu.memory_space<vmem>>, %arg3: memref<32x32xf32, #tpu.memory_space<vmem>>, %arg4: memref<32x128xf32, #tpu.memory_space<vmem>>, %arg5: memref<1x128xf32, #tpu.memory_space<vmem>>, %arg6: memref<128x32xf32, #tpu.memory_space<vmem>>, %arg7: memref<128x32xf32, #tpu.memory_space<vmem>>) attributes {dimension_semantics = [#tpu.dimension_semantics<arbitrary>], iteration_bounds = array<i64: 1>, scalar_prefetch = 0 : i64, scratch_operands = 1 : i64, tpu.core_type = #tpu.core_type<tc>, window_params = [{transform_indices = @transform_0, window_bounds = array<i64: 128, 128>}, {pipeline_mode = #tpu.pipeline_mode<synchronous>, transform_indices = @transform_1, window_bounds = array<i64: 128, 32>}, {pipeline_mode = #tpu.pipeline_mode<synchronous>, transform_indices = @transform_2, window_bounds = array<i64: 32, 32>}, {pipeline_mode = #tpu.pipeline_mode<synchronous>, transform_indices = @transform_3, window_bounds = array<i64: 32, 128>}, {pipeline_mode = #tpu.pipeline_mode<synchronous>, transform_indices = @transform_4, window_bounds = array<i64: 1, 128>}, {transform_indices = @transform_5, window_bounds = array<i64: 128, 32>}]} {
    %c0_i32 = arith.constant 0 : i32
    %0 = arith.cmpi eq, %arg0, %c0_i32 : i32
    %1 = arith.extui %0 : i1 to i32
    %c0_i32_0 = arith.constant 0 : i32
    %2 = arith.cmpi ne, %1, %c0_i32_0 : i32
    scf.if %2 {
      %c0_7 = arith.constant 0 : index
      %c0_8 = arith.constant 0 : index
      %9 = vector.load %arg3[%c0_7, %c0_8] : memref<32x32xf32, #tpu.memory_space<vmem>>, vector<32x32xf32>
      %c0_9 = arith.constant 0 : index
      %c0_10 = arith.constant 0 : index
      %10 = vector.load %arg4[%c0_9, %c0_10] : memref<32x128xf32, #tpu.memory_space<vmem>>, vector<32x128xf32>
      %cst_11 = arith.constant dense<0.000000e+00> : vector<32x128xf32>
      %11 = tpu.matmul %9, %10, %cst_11 {dimension_numbers = #tpu.dot_dimension_numbers<[1], [0], [0], [1], [0, 0, 1, 1], [], []>} : vector<32x32xf32>, vector<32x128xf32>, vector<32x128xf32> -> vector<32x128xf32>
      %c0_12 = arith.constant 0 : index
      %c0_13 = arith.constant 0 : index
      %12 = vector.load %arg5[%c0_12, %c0_13] : memref<1x128xf32, #tpu.memory_space<vmem>>, vector<1x128xf32>
      %13 = vector.broadcast %12 : vector<1x128xf32> to vector<32x128xf32>
      %14 = arith.addf %11, %13 : vector<32x128xf32>
      %15 = vector.extract_strided_slice %14 {offsets = [0, 0], sizes = [32, 32], strides = [1, 1]} : vector<32x128xf32> to vector<32x32xf32>
      %16 = arith.negf %15 : vector<32x32xf32>
      %17 = math.exp %16 : vector<32x32xf32>
      %cst_14 = arith.constant 1.000000e+00 : f32
      %18 = vector.broadcast %cst_14 : f32 to vector<32x32xf32>
      %19 = arith.addf %18, %17 : vector<32x32xf32>
      %20 = arith.divf %18, %19 : vector<32x32xf32>
      %21 = vector.extract_strided_slice %14 {offsets = [0, 32], sizes = [32, 32], strides = [1, 1]} : vector<32x128xf32> to vector<32x32xf32>
      %22 = arith.negf %21 : vector<32x32xf32>
      %23 = math.exp %22 : vector<32x32xf32>
      %cst_15 = arith.constant 1.000000e+00 : f32
      %24 = vector.broadcast %cst_15 : f32 to vector<32x32xf32>
      %25 = arith.addf %24, %23 : vector<32x32xf32>
      %26 = arith.divf %24, %25 : vector<32x32xf32>
      %27 = vector.extract_strided_slice %14 {offsets = [0, 64], sizes = [32, 32], strides = [1, 1]} : vector<32x128xf32> to vector<32x32xf32>
      %28 = vector.extract_strided_slice %14 {offsets = [0, 96], sizes = [32, 32], strides = [1, 1]} : vector<32x128xf32> to vector<32x32xf32>
      %29 = arith.mulf %20, %28 : vector<32x32xf32>
      %30 = arith.addf %27, %29 : vector<32x32xf32>
      %31 = math.tanh %30 : vector<32x32xf32>
      %cst_16 = arith.constant 1.000000e+00 : f32
      %32 = vector.broadcast %cst_16 : f32 to vector<32x32xf32>
      %33 = arith.subf %32, %26 : vector<32x32xf32>
      %34 = arith.mulf %33, %31 : vector<32x32xf32>
      %35 = arith.mulf %26, %9 : vector<32x32xf32>
      %36 = arith.addf %34, %35 : vector<32x32xf32>
      %c0_17 = arith.constant 0 : index
      %c0_18 = arith.constant 0 : index
      %37 = vector.load %arg2[%c0_17, %c0_18] : memref<128x32xf32, #tpu.memory_space<vmem>>, vector<128x32xf32>
      %cst_19 = arith.constant dense<0.000000e+00> : vector<128x32xf32>
      %38 = tpu.matmul %37, %36, %cst_19 {dimension_numbers = #tpu.dot_dimension_numbers<[1], [0], [0], [1], [0, 0, 1, 1], [], []>} : vector<128x32xf32>, vector<32x32xf32>, vector<128x32xf32> -> vector<128x32xf32>
      %c0_20 = arith.constant 0 : index
      %c0_21 = arith.constant 0 : index
      %39 = vector.load %arg7[%c0_20, %c0_21] : memref<128x32xf32, #tpu.memory_space<vmem>>, vector<128x32xf32>
      tpu.vector_store %arg7[%c0_20, %c0_21], %38 {strides = array<i32>} : memref<128x32xf32, #tpu.memory_space<vmem>>, vector<128x32xf32>,
    } else {
    }
    %c0 = arith.constant 0 : index
    %c0_1 = arith.constant 0 : index
    %3 = vector.load %arg1[%c0, %c0_1] : memref<128x128xf32, #tpu.memory_space<vmem>>, vector<128x128xf32>
    %c0_2 = arith.constant 0 : index
    %c0_3 = arith.constant 0 : index
    %4 = vector.load %arg7[%c0_2, %c0_3] : memref<128x32xf32, #tpu.memory_space<vmem>>, vector<128x32xf32>
    %cst = arith.constant dense<0.000000e+00> : vector<128x32xf32>
    %5 = tpu.matmul %3, %4, %cst {dimension_numbers = #tpu.dot_dimension_numbers<[1], [0], [0], [1], [0, 0, 1, 1], [], []>} : vector<128x128xf32>, vector<128x32xf32>, vector<128x32xf32> -> vector<128x32xf32>
    %cst_4 = arith.constant 0.000000e+00 : f32
    %6 = vector.broadcast %cst_4 : f32 to vector<128x32xf32>
    %7 = arith.maximumf %5, %6 : vector<128x32xf32>
    %c0_5 = arith.constant 0 : index
    %c0_6 = arith.constant 0 : index
    %8 = vector.load %arg6[%c0_5, %c0_6] : memref<128x32xf32, #tpu.memory_space<vmem>>, vector<128x32xf32>
    tpu.vector_store %arg6[%c0_5, %c0_6], %7 {strides = array<i32>} : memref<128x32xf32, #tpu.memory_space<vmem>>, vector<128x32xf32>,
    return
  }
  func.func @transform_0(%arg0: i32) -> (i32, i32) {
    %c0_i32 = arith.constant 0 : i32
    %c0_i32_0 = arith.constant 0 : i32
    return %arg0, %c0_i32 : i32, i32
  }
  func.func @transform_1(%arg0: i32) -> (i32, i32) {
    %c0_i32 = arith.constant 0 : i32
    %c0_i32_0 = arith.constant 0 : i32
    %c0_i32_1 = arith.constant 0 : i32
    return %c0_i32, %c0_i32_0 : i32, i32
  }
  func.func @transform_2(%arg0: i32) -> (i32, i32) {
    %c0_i32 = arith.constant 0 : i32
    %c0_i32_0 = arith.constant 0 : i32
    %c0_i32_1 = arith.constant 0 : i32
    return %c0_i32, %c0_i32_0 : i32, i32
  }
  func.func @transform_3(%arg0: i32) -> (i32, i32) {
    %c0_i32 = arith.constant 0 : i32
    %c0_i32_0 = arith.constant 0 : i32
    %c0_i32_1 = arith.constant 0 : i32
    return %c0_i32, %c0_i32_0 : i32, i32
  }
  func.func @transform_4(%arg0: i32) -> (i32, i32) {
    %c0_i32 = arith.constant 0 : i32
    %c0_i32_0 = arith.constant 0 : i32
    %c0_i32_1 = arith.constant 0 : i32
    return %c0_i32, %c0_i32_0 : i32, i32
  }
  func.func @transform_5(%arg0: i32) -> (i32, i32) {
    %c0_i32 = arith.constant 0 : i32
    %c0_i32_0 = arith.constant 0 : i32
    return %arg0, %c0_i32 : i32, i32
  }
}

</mosaic_0001>

<llo_original>
// kernel: mul.1
$region0: #{mul.1}
  #allocation0 [shape = 's32[1]{0}', space=sflag, size = 0x4, scoped, tag = 'scoped memory for mul.1']
  %s0 = inlined_call_operand.vmem [shape: f32[384], index: 0, kind: input, shape index: {}]
  %s1 = inlined_call_operand.vmem [shape: f32[384], index: 1, kind: input, shape index: {}]
  %s2 = inlined_call_operand.vmem [shape: f32[384], index: 2, kind: output, shape index: {}]
  %v3 = vld [vmem:[%s0] sm:$0x7]
  %v4 = vld [vmem:[%s1] sm:$0x7]
  %5 = xla_tuple %v3, %v4
  %6 = xla_tuple %5
  %v7 = vmul.f32 %v3, %v4
  %8 = xla_tuple %v7
  %9 = vst [vmem:[%s2] sm:$0xf] %v7

// kernel: egcn_layer_forward.1
$region0: #{egcn_layer_forward.1}
  #allocation0 [shape = 'u32[]', space=smem, size = 0x4, offset = 0x4, fixed_abs, tag = 'smem constant byte address 0x4 - core index']
  #allocation1 [shape = 'u32[72,128]{1,0:T(1,128)}', space=vmem, size = 0x9000, scoped, tag = 'internal scratch']
  #allocation2 [shape = 'f32[128,32]{1,0:T(8,128)}', space=vmem, size = 0x10000, scoped, tag = 'scratch operand']
  %s0 = inlined_call_operand.vmem [shape: f32[128,128], index: 0, kind: input, shape index: {}]
  %s1 = inlined_call_operand.vmem [shape: f32[128,32], index: 1, kind: input, shape index: {}]
  %s2 = inlined_call_operand.vmem [shape: f32[32,32], index: 2, kind: input, shape index: {}]
  %s3 = inlined_call_operand.vmem [shape: f32[32,128], index: 3, kind: input, shape index: {}]
  %s4 = inlined_call_operand.vmem [shape: f32[1,128], index: 4, kind: input, shape index: {}]
  %s5 = inlined_call_operand.vmem [shape: f32[128,32], index: 5, kind: output, shape index: {}]
  %s6 = sld [smem:[#allocation0]]
  $region34: #{egcn_layer_forward.1} parent=0
    _
  %s8 = ssub.s32 1, %s6
  %s9 = scalar_select 0, %s8, %s6
  // Predicated region
  $region2: #{egcn_layer_forward.1} parent=0 // pred_check
    _
  $region3: #{egcn_layer_forward.1} parent=0 // pred_check_branch
    %11 = sbr.rel (0) target = $region5
  $region4: #{egcn_layer_forward.1} parent=0 // pred_region
    _
  $region5: #{egcn_layer_forward.1} parent=0 // pred_fallthru
    _
  // Predicated region
  $region6: #{egcn_layer_forward.1} parent=0 // pred_check
    _
  $region7: #{egcn_layer_forward.1} parent=0 // pred_check_branch
    %13 = sbr.rel (0) target = $region9
  $region8: #{egcn_layer_forward.1} parent=0 // pred_region
    _
  $region9: #{egcn_layer_forward.1} parent=0 // pred_fallthru
    _
  // Predicated region
  $region10: #{egcn_layer_forward.1} parent=0 // pred_check
    _
  $region11: #{egcn_layer_forward.1} parent=0 // pred_check_branch
    %15 = sbr.rel (0) target = $region13
  $region12: #{egcn_layer_forward.1} parent=0 // pred_region
    _
  $region13: #{egcn_layer_forward.1} parent=0 // pred_fallthru
    _
  // Predicated region
  $region14: #{egcn_layer_forward.1} parent=0 // pred_check
    _
  $region15: #{egcn_layer_forward.1} parent=0 // pred_check_branch
    %17 = sbr.rel (0) target = $region17
  $region16: #{egcn_layer_forward.1} parent=0 // pred_region
    _
  $region17: #{egcn_layer_forward.1} parent=0 // pred_fallthru
    _
  // Predicated region
  $region18: #{egcn_layer_forward.1} parent=0 // pred_check
    _
  $region19: #{egcn_layer_forward.1} parent=0 // pred_check_branch
    %19 = sbr.rel (0) target = $region21
  $region20: #{egcn_layer_forward.1} parent=0 // pred_region
    _
  $region21: #{egcn_layer_forward.1} parent=0 // pred_fallthru
    _
  %p20 = scmp.eq.s32.totalorder 0, 0
  // Predicated region
  $region22: #{egcn_layer_forward.1} parent=0 // pred_check
    %p21 = pneg %p20
  $region23: #{egcn_layer_forward.1} parent=0 // pred_check_branch
    %23 = sbr.rel (%p21) target = $region25
  $region24: #{egcn_layer_forward.1} parent=0 // pred_region
    %v24 = vld [vmem:[%s2] sm:$0xff]
    %v25 = vld [vmem:[%s2 + $0x8] sm:$0xff]
    %v26 = vld [vmem:[%s2 + $0x10] sm:$0xff]
    %v27 = vld [vmem:[%s2 + $0x18] sm:$0xff]
    %v28 = vld [vmem:[%s3] sm:$0xff]
    %v29 = vld [vmem:[%s3 + $0x8] sm:$0xff]
    %v30 = vld [vmem:[%s3 + $0x10] sm:$0xff]
    %v31 = vld [vmem:[%s3 + $0x18] sm:$0xff]
    %v32 = vld [vmem:[%s4] sm:$0x1]
    %v34 = vperm.slane %v32, 0
    %vm36 = vcmask 261120
    %v38 = vsel %vm36, %v24, 0
    %v41 = vsel %vm36, %v25, 0
    %v44 = vsel %vm36, %v26, 0
    %v47 = vsel %vm36, %v27, 0
    %49 = vmatpush.msra.mxu0 0.0
    %50 = vmatpush.msra.mxu0 0.0
    %51 = vmatpush.msra.mxu0 0.0
    %52 = vmatpush.msra.mxu0 0.0
    %53 = vmatpush.msra.mxu0 0.0
    %54 = vmatpush.msra.mxu0 0.0
    %55 = vmatpush.msra.mxu0 0.0
    %56 = vmatpush.msra.mxu0 0.0
    %57 = vmatpush.msra.mxu0 0.0
    %58 = vmatpush.msra.mxu0 0.0
    %59 = vmatpush.msra.mxu0 0.0
    %60 = vmatpush.msra.mxu0 0.0
    %61 = vmatpush.msra.mxu0 %v31
    %62 = vmatpush.msra.mxu0 %v30
    %63 = vmatpush.msra.mxu0 %v29
    %64 = vmatpush.msra.mxu0 %v28
    %65 = vmatmul.f32.gmra.mxu0 %v38
    %v66 = vpop.f32.mrf.mxu0
    %v67 = vadd.f32 %v34, %v66
    %68 = vmatmul.f32.gmra.mxu0 %v41
    %v69 = vpop.f32.mrf.mxu0
    %v70 = vadd.f32 %v34, %v69
    %71 = vmatmul.f32.gmra.mxu0 %v44
    %v72 = vpop.f32.mrf.mxu0
    %v73 = vadd.f32 %v34, %v72
    %74 = vmatmul.f32.gmra.mxu0 %v47
    %v75 = vpop.f32.mrf.mxu0
    %v76 = vadd.f32 %v34, %v75
    %77 = vdwg.mxu0
    %v78 = vxor.u32 %v67, 2147483648
    %v79 = vxor.u32 %v70, 2147483648
    %v80 = vxor.u32 %v73, 2147483648
    %v81 = vxor.u32 %v76, 2147483648
    %v82 = vmul.f32 %v78, 1.442695
    %v83 = vpow.pop %v82
    %v84 = vmul.f32 %v79, 1.442695
    %v85 = vpow.pop %v84
    %v86 = vmul.f32 %v80, 1.442695
    %v87 = vpow.pop %v86
    %v88 = vmul.f32 %v81, 1.442695
    %v89 = vpow.pop %v88
    %v90 = vadd.f32 %v83, 1.0
    %v91 = vadd.f32 %v85, 1.0
    %v92 = vadd.f32 %v87, 1.0
    %v93 = vadd.f32 %v89, 1.0
    %v94 = vrcp.pop %v90
    %v95 = vmul.f32 %v90, %v94
    %v96 = vsub.f32 1.0, %v95
    %v97 = vmul.f32 %v94, %v96
    %v98 = vadd.f32 %v94, %v97
    %vm99 = vweird.f32 %v90
    %vm100 = vweird.f32 %v94
    %vm101 = vmor %vm99, %vm100
    %v102 = vsel %vm101, %v94, %v98
    %v103 = vand.u32 2147483647, %v90
    %vm104 = vcmp.eq.f32.partialorder %v103, 8.507059e+37
    %v105 = vand.u32 %v90, 2147483648
    %v106 = vor.u32 1.1754944e-38, %v105
    %v107 = vsel %vm104, %v106, %v102
    %v108 = vmul.f32 1.0, %v107
    %v109 = vrcp.pop %v91
    %v110 = vmul.f32 %v91, %v109
    %v111 = vsub.f32 1.0, %v110
    %v112 = vmul.f32 %v109, %v111
    %v113 = vadd.f32 %v109, %v112
    %vm114 = vweird.f32 %v91
    %vm115 = vweird.f32 %v109
    %vm116 = vmor %vm114, %vm115
    %v117 = vsel %vm116, %v109, %v113
    %v118 = vand.u32 2147483647, %v91
    %vm119 = vcmp.eq.f32.partialorder %v118, 8.507059e+37
    %v120 = vand.u32 %v91, 2147483648
    %v121 = vor.u32 1.1754944e-38, %v120
    %v122 = vsel %vm119, %v121, %v117
    %v123 = vmul.f32 1.0, %v122
    %v124 = vrcp.pop %v92
    %v125 = vmul.f32 %v92, %v124
    %v126 = vsub.f32 1.0, %v125
    %v127 = vmul.f32 %v124, %v126
    %v128 = vadd.f32 %v124, %v127
    %vm129 = vweird.f32 %v92
    %vm130 = vweird.f32 %v124
    %vm131 = vmor %vm129, %vm130
    %v132 = vsel %vm131, %v124, %v128
    %v133 = vand.u32 2147483647, %v92
    %vm134 = vcmp.eq.f32.partialorder %v133, 8.507059e+37
    %v135 = vand.u32 %v92, 2147483648
    %v136 = vor.u32 1.1754944e-38, %v135
    %v137 = vsel %vm134, %v136, %v132
    %v138 = vmul.f32 1.0, %v137
    %v139 = vrcp.pop %v93
    %v140 = vmul.f32 %v93, %v139
    %v141 = vsub.f32 1.0, %v140
    %v142 = vmul.f32 %v139, %v141
    %v143 = vadd.f32 %v139, %v142
    %vm144 = vweird.f32 %v93
    %vm145 = vweird.f32 %v139
    %vm146 = vmor %vm144, %vm145
    %v147 = vsel %vm146, %v139, %v143
    %v148 = vand.u32 2147483647, %v93
    %vm149 = vcmp.eq.f32.partialorder %v148, 8.507059e+37
    %v150 = vand.u32 %v93, 2147483648
    %v151 = vor.u32 1.1754944e-38, %v150
    %v152 = vsel %vm149, %v151, %v147
    %v153 = vmul.f32 1.0, %v152
    %158 = vrot.lane.b32.xlu0 %v67, 32
    %v159 = vpop.permute.xlu0 %158
    %160 = vrot.lane.b32.xlu0 %v70, 32
    %v161 = vpop.permute.xlu0 %160
    %162 = vrot.lane.b32.xlu0 %v73, 32
    %v163 = vpop.permute.xlu0 %162
    %164 = vrot.lane.b32.xlu0 %v76, 32
    %v165 = vpop.permute.xlu0 %164
    %v170 = vmul.f32 %v108, %v159
    %v171 = vmul.f32 %v123, %v161
    %v172 = vmul.f32 %v138, %v163
    %v173 = vmul.f32 %v153, %v165
    %178 = vrot.lane.b32.xlu0 %v170, 64
    %v179 = vpop.permute.xlu0 %178
    %180 = vrot.lane.b32.xlu0 %v171, 64
    %v181 = vpop.permute.xlu0 %180
    %182 = vrot.lane.b32.xlu0 %v172, 64
    %v183 = vpop.permute.xlu0 %182
    %184 = vrot.lane.b32.xlu0 %v173, 64
    %v185 = vpop.permute.xlu0 %184
    %v190 = vadd.f32 %v67, %v179
    %v191 = vadd.f32 %v70, %v181
    %v192 = vadd.f32 %v73, %v183
    %v193 = vadd.f32 %v76, %v185
    %v194 = vtanh.pop %v190
    %v195 = vtanh.pop %v191
    %v196 = vtanh.pop %v192
    %v197 = vtanh.pop %v193
    %v198 = vsub.f32 1.0, %v108
    %v199 = vsub.f32 1.0, %v123
    %v200 = vsub.f32 1.0, %v138
    %v201 = vsub.f32 1.0, %v153
    %206 = vrot.lane.b32.xlu0 %v194, 96
    %v207 = vpop.permute.xlu0 %206
    %208 = vrot.lane.b32.xlu0 %v195, 96
    %v209 = vpop.permute.xlu0 %208
    %210 = vrot.lane.b32.xlu0 %v196, 96
    %v211 = vpop.permute.xlu0 %210
    %212 = vrot.lane.b32.xlu0 %v197, 96
    %v213 = vpop.permute.xlu0 %212
    %v218 = vmul.f32 %v198, %v207
    %v219 = vmul.f32 %v199, %v209
    %v220 = vmul.f32 %v200, %v211
    %v221 = vmul.f32 %v201, %v213
    %222 = vrot.lane.b32.xlu0 %v24, 32
    %v223 = vpop.permute.xlu0 %222
    %224 = vrot.lane.b32.xlu0 %v25, 32
    %v225 = vpop.permute.xlu0 %224
    %226 = vrot.lane.b32.xlu0 %v26, 32
    %v227 = vpop.permute.xlu0 %226
    %228 = vrot.lane.b32.xlu0 %v27, 32
    %v229 = vpop.permute.xlu0 %228
    %v234 = vmul.f32 %v108, %v223
    %v235 = vmul.f32 %v123, %v225
    %v236 = vmul.f32 %v138, %v227
    %v237 = vmul.f32 %v153, %v229
    %v238 = vadd.f32 %v218, %v234
    %v239 = vadd.f32 %v219, %v235
    %v240 = vadd.f32 %v220, %v236
    %v241 = vadd.f32 %v221, %v237
    %v242 = vld [vmem:[%s1] sm:$0xff]
    %v243 = vld [vmem:[%s1 + $0x8] sm:$0xff]
    %v244 = vld [vmem:[%s1 + $0x10] sm:$0xff]
    %v245 = vld [vmem:[%s1 + $0x18] sm:$0xff]
    %v246 = vld [vmem:[%s1 + $0x20] sm:$0xff]
    %v247 = vld [vmem:[%s1 + $0x28] sm:$0xff]
    %v248 = vld [vmem:[%s1 + $0x30] sm:$0xff]
    %v249 = vld [vmem:[%s1 + $0x38] sm:$0xff]
    %v250 = vld [vmem:[%s1 + $0x40] sm:$0xff]
    %v251 = vld [vmem:[%s1 + $0x48] sm:$0xff]
    %v252 = vld [vmem:[%s1 + $0x50] sm:$0xff]
    %v253 = vld [vmem:[%s1 + $0x58] sm:$0xff]
    %v254 = vld [vmem:[%s1 + $0x60] sm:$0xff]
    %v255 = vld [vmem:[%s1 + $0x68] sm:$0xff]
    %v256 = vld [vmem:[%s1 + $0x70] sm:$0xff]
    %v257 = vld [vmem:[%s1 + $0x78] sm:$0xff]
    %262 = vrot.lane.b32.xlu0 %v238, 96
    %v263 = vpop.permute.xlu0 %262
    %264 = vrot.lane.b32.xlu0 %v239, 96
    %v265 = vpop.permute.xlu0 %264
    %266 = vrot.lane.b32.xlu0 %v240, 96
    %v267 = vpop.permute.xlu0 %266
    %268 = vrot.lane.b32.xlu0 %v241, 96
    %v269 = vpop.permute.xlu0 %268
    %v275 = vsel %vm36, %v242, 0
    %v278 = vsel %vm36, %v243, 0
    %v281 = vsel %vm36, %v244, 0
    %v284 = vsel %vm36, %v245, 0
    %v287 = vsel %vm36, %v246, 0
    %v290 = vsel %vm36, %v247, 0
    %v293 = vsel %vm36, %v248, 0
    %v296 = vsel %vm36, %v249, 0
    %v299 = vsel %vm36, %v250, 0
    %v302 = vsel %vm36, %v251, 0
    %v305 = vsel %vm36, %v252, 0
    %v308 = vsel %vm36, %v253, 0
    %v311 = vsel %vm36, %v254, 0
    %v314 = vsel %vm36, %v255, 0
    %v317 = vsel %vm36, %v256, 0
    %v320 = vsel %vm36, %v257, 0
    %322 = vmatpush.msra.mxu0 0.0
    %323 = vmatpush.msra.mxu0 0.0
    %324 = vmatpush.msra.mxu0 0.0
    %325 = vmatpush.msra.mxu0 0.0
    %326 = vmatpush.msra.mxu0 0.0
    %327 = vmatpush.msra.mxu0 0.0
    %328 = vmatpush.msra.mxu0 0.0
    %329 = vmatpush.msra.mxu0 0.0
    %330 = vmatpush.msra.mxu0 0.0
    %331 = vmatpush.msra.mxu0 0.0
    %332 = vmatpush.msra.mxu0 0.0
    %333 = vmatpush.msra.mxu0 0.0
    %334 = vmatpush.msra.mxu0 %v269
    %335 = vmatpush.msra.mxu0 %v267
    %336 = vmatpush.msra.mxu0 %v265
    %337 = vmatpush.msra.mxu0 %v263
    %338 = vmatmul.f32.gmra.mxu0 %v275
    %v339 = vpop.f32.mrf.mxu0
    %v340 = vadd.f32 0.0, %v339
    %341 = vmatmul.f32.gmra.mxu0 %v278
    %v342 = vpop.f32.mrf.mxu0
    %v343 = vadd.f32 0.0, %v342
    %344 = vmatmul.f32.gmra.mxu0 %v281
    %v345 = vpop.f32.mrf.mxu0
    %v346 = vadd.f32 0.0, %v345
    %347 = vmatmul.f32.gmra.mxu0 %v284
    %v348 = vpop.f32.mrf.mxu0
    %v349 = vadd.f32 0.0, %v348
    %350 = vmatmul.f32.gmra.mxu0 %v287
    %v351 = vpop.f32.mrf.mxu0
    %v352 = vadd.f32 0.0, %v351
    %353 = vmatmul.f32.gmra.mxu0 %v290
    %v354 = vpop.f32.mrf.mxu0
    %v355 = vadd.f32 0.0, %v354
    %356 = vmatmul.f32.gmra.mxu0 %v293
    %v357 = vpop.f32.mrf.mxu0
    %v358 = vadd.f32 0.0, %v357
    %359 = vmatmul.f32.gmra.mxu0 %v296
    %v360 = vpop.f32.mrf.mxu0
    %v361 = vadd.f32 0.0, %v360
    %362 = vmatmul.f32.gmra.mxu0 %v299
    %v363 = vpop.f32.mrf.mxu0
    %v364 = vadd.f32 0.0, %v363
    %365 = vmatmul.f32.gmra.mxu0 %v302
    %v366 = vpop.f32.mrf.mxu0
    %v367 = vadd.f32 0.0, %v366
    %368 = vmatmul.f32.gmra.mxu0 %v305
    %v369 = vpop.f32.mrf.mxu0
    %v370 = vadd.f32 0.0, %v369
    %371 = vmatmul.f32.gmra.mxu0 %v308
    %v372 = vpop.f32.mrf.mxu0
    %v373 = vadd.f32 0.0, %v372
    %374 = vmatmul.f32.gmra.mxu0 %v311
    %v375 = vpop.f32.mrf.mxu0
    %v376 = vadd.f32 0.0, %v375
    %377 = vmatmul.f32.gmra.mxu0 %v314
    %v378 = vpop.f32.mrf.mxu0
    %v379 = vadd.f32 0.0, %v378
    %380 = vmatmul.f32.gmra.mxu0 %v317
    %v381 = vpop.f32.mrf.mxu0
    %v382 = vadd.f32 0.0, %v381
    %383 = vmatmul.f32.gmra.mxu0 %v320
    %v384 = vpop.f32.mrf.mxu0
    %v385 = vadd.f32 0.0, %v384
    %386 = vdwg.mxu0
    %387 = vst.msk [vmem:[#allocation2] sm:$0xff] %vm36, %v340
    %388 = vst.msk [vmem:[#allocation2 + $0x8] sm:$0xff] %vm36, %v343
    %389 = vst.msk [vmem:[#allocation2 + $0x10] sm:$0xff] %vm36, %v346
    %390 = vst.msk [vmem:[#allocation2 + $0x18] sm:$0xff] %vm36, %v349
    %391 = vst.msk [vmem:[#allocation2 + $0x20] sm:$0xff] %vm36, %v352
    %392 = vst.msk [vmem:[#allocation2 + $0x28] sm:$0xff] %vm36, %v355
    %393 = vst.msk [vmem:[#allocation2 + $0x30] sm:$0xff] %vm36, %v358
    %394 = vst.msk [vmem:[#allocation2 + $0x38] sm:$0xff] %vm36, %v361
    %395 = vst.msk [vmem:[#allocation2 + $0x40] sm:$0xff] %vm36, %v364
    %396 = vst.msk [vmem:[#allocation2 + $0x48] sm:$0xff] %vm36, %v367
    %397 = vst.msk [vmem:[#allocation2 + $0x50] sm:$0xff] %vm36, %v370
    %398 = vst.msk [vmem:[#allocation2 + $0x58] sm:$0xff] %vm36, %v373
    %399 = vst.msk [vmem:[#allocation2 + $0x60] sm:$0xff] %vm36, %v376
    %400 = vst.msk [vmem:[#allocation2 + $0x68] sm:$0xff] %vm36, %v379
    %401 = vst.msk [vmem:[#allocation2 + $0x70] sm:$0xff] %vm36, %v382
    %402 = vst.msk [vmem:[#allocation2 + $0x78] sm:$0xff] %vm36, %v385
  $region25: #{egcn_layer_forward.1} parent=0 // pred_fallthru
    _
  %v403 = vld [vmem:[%s0] sm:$0xff]
  %v404 = vld [vmem:[%s0 + $0x8] sm:$0xff]
  %v405 = vld [vmem:[%s0 + $0x10] sm:$0xff]
  %v406 = vld [vmem:[%s0 + $0x18] sm:$0xff]
  %v407 = vld [vmem:[%s0 + $0x20] sm:$0xff]
  %v408 = vld [vmem:[%s0 + $0x28] sm:$0xff]
  %v409 = vld [vmem:[%s0 + $0x30] sm:$0xff]
  %v410 = vld [vmem:[%s0 + $0x38] sm:$0xff]
  %v411 = vld [vmem:[%s0 + $0x40] sm:$0xff]
  %v412 = vld [vmem:[%s0 + $0x48] sm:$0xff]
  %v413 = vld [vmem:[%s0 + $0x50] sm:$0xff]
  %v414 = vld [vmem:[%s0 + $0x58] sm:$0xff]
  %v415 = vld [vmem:[%s0 + $0x60] sm:$0xff]
  %v416 = vld [vmem:[%s0 + $0x68] sm:$0xff]
  %v417 = vld [vmem:[%s0 + $0x70] sm:$0xff]
  %v418 = vld [vmem:[%s0 + $0x78] sm:$0xff]
  %v419 = vld [vmem:[#allocation2] sm:$0xff]
  %v420 = vld [vmem:[#allocation2 + $0x8] sm:$0xff]
  %v421 = vld [vmem:[#allocation2 + $0x10] sm:$0xff]
  %v422 = vld [vmem:[#allocation2 + $0x18] sm:$0xff]
  %v423 = vld [vmem:[#allocation2 + $0x20] sm:$0xff]
  %v424 = vld [vmem:[#allocation2 + $0x28] sm:$0xff]
  %v425 = vld [vmem:[#allocation2 + $0x30] sm:$0xff]
  %v426 = vld [vmem:[#allocation2 + $0x38] sm:$0xff]
  %v427 = vld [vmem:[#allocation2 + $0x40] sm:$0xff]
  %v428 = vld [vmem:[#allocation2 + $0x48] sm:$0xff]
  %v429 = vld [vmem:[#allocation2 + $0x50] sm:$0xff]
  %v430 = vld [vmem:[#allocation2 + $0x58] sm:$0xff]
  %v431 = vld [vmem:[#allocation2 + $0x60] sm:$0xff]
  %v432 = vld [vmem:[#allocation2 + $0x68] sm:$0xff]
  %v433 = vld [vmem:[#allocation2 + $0x70] sm:$0xff]
  %v434 = vld [vmem:[#allocation2 + $0x78] sm:$0xff]
  %435 = vmatpush.msra.mxu0 %v434
  %436 = vmatpush.msra.mxu0 %v433
  %437 = vmatpush.msra.mxu0 %v432
  %438 = vmatpush.msra.mxu0 %v431
  %439 = vmatpush.msra.mxu0 %v430
  %440 = vmatpush.msra.mxu0 %v429
  %441 = vmatpush.msra.mxu0 %v428
  %442 = vmatpush.msra.mxu0 %v427
  %443 = vmatpush.msra.mxu0 %v426
  %444 = vmatpush.msra.mxu0 %v425
  %445 = vmatpush.msra.mxu0 %v424
  %446 = vmatpush.msra.mxu0 %v423
  %447 = vmatpush.msra.mxu0 %v422
  %448 = vmatpush.msra.mxu0 %v421
  %449 = vmatpush.msra.mxu0 %v420
  %450 = vmatpush.msra.mxu0 %v419
  %451 = vmatmul.f32.gmra.mxu0 %v403
  %v452 = vpop.f32.mrf.mxu0
  %v453 = vadd.f32 0.0, %v452
  %454 = vmatmul.f32.gmra.mxu0 %v404
  %v455 = vpop.f32.mrf.mxu0
  %v456 = vadd.f32 0.0, %v455
  %457 = vmatmul.f32.gmra.mxu0 %v405
  %v458 = vpop.f32.mrf.mxu0
  %v459 = vadd.f32 0.0, %v458
  %460 = vmatmul.f32.gmra.mxu0 %v406
  %v461 = vpop.f32.mrf.mxu0
  %v462 = vadd.f32 0.0, %v461
  %463 = vmatmul.f32.gmra.mxu0 %v407
  %v464 = vpop.f32.mrf.mxu0
  %v465 = vadd.f32 0.0, %v464
  %466 = vmatmul.f32.gmra.mxu0 %v408
  %v467 = vpop.f32.mrf.mxu0
  %v468 = vadd.f32 0.0, %v467
  %469 = vmatmul.f32.gmra.mxu0 %v409
  %v470 = vpop.f32.mrf.mxu0
  %v471 = vadd.f32 0.0, %v470
  %472 = vmatmul.f32.gmra.mxu0 %v410
  %v473 = vpop.f32.mrf.mxu0
  %v474 = vadd.f32 0.0, %v473
  %475 = vmatmul.f32.gmra.mxu0 %v411
  %v476 = vpop.f32.mrf.mxu0
  %v477 = vadd.f32 0.0, %v476
  %478 = vmatmul.f32.gmra.mxu0 %v412
  %v479 = vpop.f32.mrf.mxu0
  %v480 = vadd.f32 0.0, %v479
  %481 = vmatmul.f32.gmra.mxu0 %v413
  %v482 = vpop.f32.mrf.mxu0
  %v483 = vadd.f32 0.0, %v482
  %484 = vmatmul.f32.gmra.mxu0 %v414
  %v485 = vpop.f32.mrf.mxu0
  %v486 = vadd.f32 0.0, %v485
  %487 = vmatmul.f32.gmra.mxu0 %v415
  %v488 = vpop.f32.mrf.mxu0
  %v489 = vadd.f32 0.0, %v488
  %490 = vmatmul.f32.gmra.mxu0 %v416
  %v491 = vpop.f32.mrf.mxu0
  %v492 = vadd.f32 0.0, %v491
  %493 = vmatmul.f32.gmra.mxu0 %v417
  %v494 = vpop.f32.mrf.mxu0
  %v495 = vadd.f32 0.0, %v494
  %496 = vmatmul.f32.gmra.mxu0 %v418
  %v497 = vpop.f32.mrf.mxu0
  %v498 = vadd.f32 0.0, %v497
  %499 = vdwg.mxu0
  %v500 = vmax.f32 %v453, 0.0
  %v501 = vmax.f32 %v456, 0.0
  %v502 = vmax.f32 %v459, 0.0
  %v503 = vmax.f32 %v462, 0.0
  %v504 = vmax.f32 %v465, 0.0
  %v505 = vmax.f32 %v468, 0.0
  %v506 = vmax.f32 %v471, 0.0
  %v507 = vmax.f32 %v474, 0.0
  %v508 = vmax.f32 %v477, 0.0
  %v509 = vmax.f32 %v480, 0.0
  %v510 = vmax.f32 %v483, 0.0
  %v511 = vmax.f32 %v486, 0.0
  %v512 = vmax.f32 %v489, 0.0
  %v513 = vmax.f32 %v492, 0.0
  %v514 = vmax.f32 %v495, 0.0
  %v515 = vmax.f32 %v498, 0.0
  %vm516 = vcmask 261120
  %517 = vst.msk [vmem:[%s5] sm:$0xff] %vm516, %v500
  %518 = vst.msk [vmem:[%s5 + $0x8] sm:$0xff] %vm516, %v501
  %519 = vst.msk [vmem:[%s5 + $0x10] sm:$0xff] %vm516, %v502
  %520 = vst.msk [vmem:[%s5 + $0x18] sm:$0xff] %vm516, %v503
  %521 = vst.msk [vmem:[%s5 + $0x20] sm:$0xff] %vm516, %v504
  %522 = vst.msk [vmem:[%s5 + $0x28] sm:$0xff] %vm516, %v505
  %523 = vst.msk [vmem:[%s5 + $0x30] sm:$0xff] %vm516, %v506
  %524 = vst.msk [vmem:[%s5 + $0x38] sm:$0xff] %vm516, %v507
  %525 = vst.msk [vmem:[%s5 + $0x40] sm:$0xff] %vm516, %v508
  %526 = vst.msk [vmem:[%s5 + $0x48] sm:$0xff] %vm516, %v509
  %527 = vst.msk [vmem:[%s5 + $0x50] sm:$0xff] %vm516, %v510
  %528 = vst.msk [vmem:[%s5 + $0x58] sm:$0xff] %vm516, %v511
  %529 = vst.msk [vmem:[%s5 + $0x60] sm:$0xff] %vm516, %v512
  %530 = vst.msk [vmem:[%s5 + $0x68] sm:$0xff] %vm516, %v513
  %531 = vst.msk [vmem:[%s5 + $0x70] sm:$0xff] %vm516, %v514
  %532 = vst.msk [vmem:[%s5 + $0x78] sm:$0xff] %vm516, %v515
  // Predicated region
  $region26: #{egcn_layer_forward.1} parent=0 // pred_check
    _
  $region27: #{egcn_layer_forward.1} parent=0 // pred_check_branch
    %534 = sbr.rel (0) target = $region29
  $region28: #{egcn_layer_forward.1} parent=0 // pred_region
    _
  $region29: #{egcn_layer_forward.1} parent=0 // pred_fallthru
    _
  // Predicated region
  $region30: #{egcn_layer_forward.1} parent=0 // pred_check
    _
  $region31: #{egcn_layer_forward.1} parent=0 // pred_check_branch
    %536 = sbr.rel (0) target = $region33
  $region32: #{egcn_layer_forward.1} parent=0 // pred_region
    _
  $region33: #{egcn_layer_forward.1} parent=0 // pred_fallthru
    _

</llo_original>
